<compile_context>
chip_gen: v7x
topology: tpu7x:2x2x1
jax: 0.10.0
libtpu: 0.0.40
codegen_flags: <defaults>
</compile_context>

<pallas_src>
import jax
import jax.numpy as jnp
from jax.experimental import pallas as pl
from jax.experimental.pallas import tpu as pltpu

_LANES = 128                 # samples per packed row (output lane width)
_PACKED = 2 * _LANES         # f32 elements per packed row (128 interleaved pairs)
_SUBLANES = 8
_MAX_TILE_ROWS = 2048        # rows/step: 2 MiB in + 1 MiB out (f32), ~6.5 MiB dbl-buffered


def _round_up(a, m):
    return ((a + m - 1) // m) * m


def _dumb_linear_kernel(b_ref, w_ref, x_ref, o_ref):
    """o = x_packed @ W + b.

    b_ref: SMEM (1,)        f32  bias scalar
    w_ref: VMEM (256, 128)  f32  de-interleave matrix (W[2j,j]=w0, W[2j+1,j]=w1)
    x_ref: VMEM (T, 256)         packed input block (128 interleaved samples/row)
    o_ref: VMEM (T, 128)         lane-dense output block
    """
    x = x_ref[...].astype(jnp.float32)
    y = jnp.dot(x, w_ref[...],
                preferred_element_type=jnp.float32,
                precision=jax.lax.Precision.HIGHEST)  # fp32 MXU contraction
    o_ref[...] = (y + b_ref[0]).astype(o_ref.dtype)


def dumb_linear(x, weight, bias, *, max_tile_rows=_MAX_TILE_ROWS):
    """x: (B, 2), weight: (1, 2) (PyTorch nn.Linear layout), bias: (1,).

    Returns DumbLinear.forward(x) semantics: shape (B,) (scalar when B == 1).
    """
    B, F = x.shape
    assert F == 2, "DumbLinear expects 2 input features"
    out_dtype = x.dtype

    # ---- grid / tile sizing -------------------------------------------------
    rows = pl.cdiv(B, _LANES)                 # 128 samples per packed row
    rows = _round_up(rows, _SUBLANES)         # sublane-dense blocks
    # >=2 grid steps whenever possible so the "parallel" axis spans both v7x
    # TensorCores; balance rows across steps so padding stays < 8 rows/step.
    grid_n = max(pl.cdiv(rows, max_tile_rows), 2 if rows >= 2 * _SUBLANES else 1)
    tile_rows = _round_up(pl.cdiv(rows, grid_n), _SUBLANES)
    rows_total = grid_n * tile_rows
    b_total = rows_total * _LANES

    # ---- operands -----------------------------------------------------------
    w = weight.reshape(2).astype(jnp.float32)
    # (256, 128) select/de-interleave matrix: column j computes w0*x[2j] + w1*x[2j+1].
    w_mat = jnp.kron(jnp.eye(_LANES, dtype=jnp.float32), w.reshape(2, 1))
    b_vec = bias.reshape(1).astype(jnp.float32)

    # Free row-major view of x — no transpose, no extra HBM pass.
    x_flat = x.reshape(-1)
    if b_total != B:
        # Only non-(8*128)-aligned batches pay this pad (and the final slice).
        x_flat = jnp.pad(x_flat, (0, 2 * (b_total - B)))
    x_packed = x_flat.reshape(rows_total, _PACKED)

    out = pl.pallas_call(
        _dumb_linear_kernel,
        grid=(grid_n,),
        in_specs=[
            pl.BlockSpec(memory_space=pltpu.MemorySpace.SMEM),      # bias scalar
            pl.BlockSpec((_PACKED, _LANES), lambda i: (0, 0)),      # W, VMEM-resident
            pl.BlockSpec((tile_rows, _PACKED), lambda i: (i, 0)),   # packed x tile
        ],
        out_specs=pl.BlockSpec((tile_rows, _LANES), lambda i: (i, 0)),
        out_shape=jax.ShapeDtypeStruct((rows_total, _LANES), out_dtype),
        compiler_params=pltpu.CompilerParams(
            dimension_semantics=("parallel",)),                     # megacore split
        cost_estimate=pl.CostEstimate(
            flops=2 * rows_total * _PACKED * _LANES + rows_total * _LANES,
            transcendentals=0,
            bytes_accessed=(rows_total * _PACKED + rows_total * _LANES
                            + _PACKED * _LANES + 1) * 4),
    )(b_vec, w_mat, x_packed)

    y = out.reshape(-1)       # free reshape: samples are already in batch order
    if b_total != B:
        y = y[:B]             # drop tail padding (skipped for aligned batches)
    return jnp.squeeze(y)     # match torch .squeeze() (scalar when B == 1)


if __name__ == "__main__":
    key = jax.random.PRNGKey(0)
    k_x, k_w, k_b = jax.random.split(key, 3)

    # Deterministic init mimicking PyTorch's U(-1/sqrt(fan_in), 1/sqrt(fan_in))
    bound = 1.0 / jnp.sqrt(2.0)
    weight = jax.random.uniform(k_w, (1, 2), minval=-bound, maxval=bound,
                                dtype=jnp.float32)
    bias = jax.random.uniform(k_b, (1,), minval=-bound, maxval=bound,
                              dtype=jnp.float32)

    fwd = jax.jit(dumb_linear)

    def ref(xv):
        return jnp.squeeze(xv @ weight.T + bias, axis=-1)

    # Aligned batch: no pad/slice pass, grid=(2,) so both v7x TCs get work.
    B = 2048
    x = jax.random.normal(k_x, (B, 2), dtype=jnp.float32)
    y = fwd(x, weight, bias)
    jax.block_until_ready(y)
    assert y.shape == (B,)
    assert jnp.allclose(y, ref(x), atol=1e-4, rtol=1e-4)

    # Ragged batch: exercises the pad + tail-slice path.
    B2 = 200
    x2 = jax.random.normal(k_x, (B2, 2), dtype=jnp.float32)
    y2 = fwd(x2, weight, bias)
    jax.block_until_ready(y2)
    assert y2.shape == (B2,)
    assert jnp.allclose(y2, ref(x2), atol=1e-4, rtol=1e-4)

    print("KERNEL_OK")
</pallas_src>

<mosaic_0001>
module attributes {stable_mosaic.version = 11 : i64} {
  func.func @_dumb_linear_kernel(%arg0: i32, %arg1: memref<1xf32, #tpu.memory_space<smem>>, %arg2: memref<256x128xf32, #tpu.memory_space<vmem>>, %arg3: memref<8x256xf32, #tpu.memory_space<vmem>>, %arg4: memref<8x128xf32, #tpu.memory_space<vmem>>) attributes {dimension_semantics = [#tpu.dimension_semantics<parallel>], iteration_bounds = array<i64: 2>, scalar_prefetch = 0 : i64, scratch_operands = 0 : i64, tpu.core_type = #tpu.core_type<tc>, window_params = [{transform_indices = @transform_0, window_bounds = array<i64: 1>}, {pipeline_mode = #tpu.pipeline_mode<synchronous>, transform_indices = @transform_1, window_bounds = array<i64: 256, 128>}, {transform_indices = @transform_2, window_bounds = array<i64: 8, 256>}, {transform_indices = @transform_3, window_bounds = array<i64: 8, 128>}]} {
    %c0 = arith.constant 0 : index
    %c0_0 = arith.constant 0 : index
    %0 = vector.load %arg3[%c0, %c0_0] : memref<8x256xf32, #tpu.memory_space<vmem>>, vector<8x256xf32>
    %c0_1 = arith.constant 0 : index
    %c0_2 = arith.constant 0 : index
    %1 = vector.load %arg2[%c0_1, %c0_2] : memref<256x128xf32, #tpu.memory_space<vmem>>, vector<256x128xf32>
    %cst = arith.constant dense<0.000000e+00> : vector<8x128xf32>
    %2 = tpu.matmul %0, %1, %cst {dimension_numbers = #tpu.dot_dimension_numbers<[1], [0], [0], [1], [0, 0, 1, 1], [], []>, precision = #tpu.contract_precision<fp32>} : vector<8x256xf32>, vector<256x128xf32>, vector<8x128xf32> -> vector<8x128xf32>
    %c0_3 = arith.constant 0 : index
    %3 = memref.load %arg1[%c0_3] : memref<1xf32, #tpu.memory_space<smem>>
    %4 = vector.broadcast %3 : f32 to vector<8x128xf32>
    %5 = arith.addf %2, %4 : vector<8x128xf32>
    %c0_4 = arith.constant 0 : index
    %c0_5 = arith.constant 0 : index
    %6 = vector.load %arg4[%c0_4, %c0_5] : memref<8x128xf32, #tpu.memory_space<vmem>>, vector<8x128xf32>
    tpu.vector_store %arg4[%c0_4, %c0_5], %5 {strides = array<i32>} : memref<8x128xf32, #tpu.memory_space<vmem>>, vector<8x128xf32>,
    return
  }
  func.func @transform_0(%arg0: i32) -> i32 {
    %c0_i32 = arith.constant 0 : i32
    %c0_i32_0 = arith.constant 0 : i32
    return %c0_i32 : i32
  }
  func.func @transform_1(%arg0: i32) -> (i32, i32) {
    %c0_i32 = arith.constant 0 : i32
    %c0_i32_0 = arith.constant 0 : i32
    %c0_i32_1 = arith.constant 0 : i32
    return %c0_i32, %c0_i32_0 : i32, i32
  }
  func.func @transform_2(%arg0: i32) -> (i32, i32) {
    %c0_i32 = arith.constant 0 : i32
    %c0_i32_0 = arith.constant 0 : i32
    return %arg0, %c0_i32 : i32, i32
  }
  func.func @transform_3(%arg0: i32) -> (i32, i32) {
    %c0_i32 = arith.constant 0 : i32
    %c0_i32_0 = arith.constant 0 : i32
    return %arg0, %c0_i32 : i32, i32
  }
}

</mosaic_0001>

<llo_original>
// kernel: dumb_linear.1
$region0: #{dumb_linear.1}
  #allocation0 [shape = 'u32[]', space=smem, size = 0x4, offset = 0x4, fixed_abs, tag = 'smem constant byte address 0x4 - core index']
  #allocation1 [shape = 'u32[144,128]{1,0:T(1,128)}', space=vmem, size = 0x12000, scoped, tag = 'internal scratch']
  #allocation2 [shape = 'f32[1]{0:T(128)S(6)}', space=smem, size = 0x200, scoped, tag = 'scoped memory for dumb_linear.1']
  %s0 = inlined_call_operand.<no memory space> [shape: f32[1], index: 0, kind: input, shape index: {}]
  %s1 = inlined_call_operand.vmem [shape: f32[256,128], index: 1, kind: input, shape index: {}]
  %s2 = inlined_call_operand.vmem [shape: f32[16,256], index: 2, kind: input, shape index: {}]
  %s3 = inlined_call_operand.hbm [shape: f32[16,128], index: 3, kind: output, shape index: {}]
  %s4 = sld [smem:[#allocation0]]
  $region45: #{dumb_linear.1} parent=0
    _
  %s6 = ssub.s32 1, %s4
  %s7 = scalar_select 0, %s6, %s4
  %8 = sst [smem:[#allocation2]] %s0
  $region1: #{dumb_linear.1} parent=0
    #allocation3 [shape = 'u8[8192]{0}', space=vmem, size = 0x2000, scoped, tag = 'output window, operand 0']
    #allocation4 [shape = 's32[2]{0}', space=sflag, size = 0x8, scoped, tag = 'scoped memory for dumb_linear.1']
    %9 = vsyncpa [#allocation4], 0
    %s10 = scalar_lea.sflag [#allocation4], 1
    %11 = vsyncpa %s10, 0
    loop: start=0, step=1, limit=4
    $region2: #{dumb_linear.1} parent=1 // loop_pre_header
      _
    $region3: #{dumb_linear.1} parent=1 // loop_header
      %s13 = sphi 0, %s17
      %p14 = scmp.ge.s32.totalorder %s13, 4
      %s21 = sphi 0, %s21
      %s23 = sphi 0, %s21
      %s24 = sphi 0, %s23
      %s38 = sphi 0, %s24
      %s42 = sphi 0, %s42
      %s44 = sphi 0, %s42
      %s45 = sphi 0, %s44
      %s59 = sphi 0, %s45
      %s65 = sphi 0, %s67
      %s68 = sphi 0, %s65
      %s69 = sphi 0, %s68
      %s85 = sphi 0, %s69
      %s91 = sphi 0, %s93
      %s94 = sphi 0, %s91
      %s95 = sphi 0, %s94
      %s111 = sphi 0, %s95
    $region4: #{dumb_linear.1} parent=1 // loop_header_branch
      %16 = sbr.rel (%p14) target = $region8
    $region5: #{dumb_linear.1} parent=1 // loop_body
      %s18 = ssub.s32 %s13, 1
      %s19 = ssub.s32 %s13, 2
      %s20 = sadd.s32 %s13, 1
      %s22 = sadd.s32 %s21, 1
      %p25 = scmp.eq.s32.totalorder %s13, 1
      %p26 = scmp.ne.s32.totalorder %s21, %s23
      %p27 = scmp.eq.s32.totalorder %s13, 0
      %p28 = por %p26, %p27
      %p29 = scmp.ne.s32.totalorder %s21, %s23
      %p30 = scmp.eq.s32.totalorder %s18, 1
      %p31 = por %p29, %p30
      %p32 = scmp.ne.s32.totalorder %s23, %s24
      %p33 = scmp.eq.s32.totalorder %s18, 0
      %p34 = por %p32, %p33
      %p35 = scmp.ne.s32.totalorder %s23, %s24
      %p36 = scmp.eq.s32.totalorder %s19, 1
      %p37 = por %p35, %p36
      %p39 = scmp.ne.s32.totalorder %s24, %s38
      %p40 = scmp.eq.s32.totalorder %s19, 0
      %p41 = por %p39, %p40
      %s43 = sadd.s32 %s42, 1
      %p46 = scmp.eq.s32.totalorder %s13, 1
      %p47 = scmp.ne.s32.totalorder %s42, %s44
      %p48 = scmp.eq.s32.totalorder %s13, 0
      %p49 = por %p47, %p48
      %p50 = scmp.ne.s32.totalorder %s42, %s44
      %p51 = scmp.eq.s32.totalorder %s18, 1
      %p52 = por %p50, %p51
      %p53 = scmp.ne.s32.totalorder %s44, %s45
      %p54 = scmp.eq.s32.totalorder %s18, 0
      %p55 = por %p53, %p54
      %p56 = scmp.ne.s32.totalorder %s44, %s45
      %p57 = scmp.eq.s32.totalorder %s19, 1
      %p58 = por %p56, %p57
      %p60 = scmp.ne.s32.totalorder %s45, %s59
      %p61 = scmp.eq.s32.totalorder %s19, 0
      %p62 = por %p60, %p61
      %s63 = ssub.s32 %s13, %s20
      %p64 = scmp.eq.s32.totalorder %s63, 0
      %s66 = sadd.s32 %s65, 1
      %s67 = scalar_select %p64, %s65, %s66
      %p70 = pneg %p64
      %p71 = scmp.eq.s32.totalorder %s13, 1
      %p72 = por %p70, %p71
      %p73 = scmp.ne.s32.totalorder %s65, %s68
      %p74 = scmp.eq.s32.totalorder %s13, 0
      %p75 = por %p73, %p74
      %p76 = scmp.ne.s32.totalorder %s65, %s68
      %p77 = scmp.eq.s32.totalorder %s18, 1
      %p78 = por %p76, %p77
      %p79 = scmp.ne.s32.totalorder %s68, %s69
      %p80 = scmp.eq.s32.totalorder %s18, 0
      %p81 = por %p79, %p80
      %p82 = scmp.ne.s32.totalorder %s68, %s69
      %p83 = scmp.eq.s32.totalorder %s19, 1
      %p84 = por %p82, %p83
      %p86 = scmp.ne.s32.totalorder %s69, %s85
      %p87 = scmp.eq.s32.totalorder %s19, 0
      %p88 = por %p86, %p87
      %s89 = ssub.s32 %s13, %s20
      %p90 = scmp.eq.s32.totalorder %s89, 0
      %s92 = sadd.s32 %s91, 1
      %s93 = scalar_select %p90, %s91, %s92
      %p96 = pneg %p90
      %p97 = scmp.eq.s32.totalorder %s13, 1
      %p98 = por %p96, %p97
      %p99 = scmp.ne.s32.totalorder %s91, %s94
      %p100 = scmp.eq.s32.totalorder %s13, 0
      %p101 = por %p99, %p100
      %p102 = scmp.ne.s32.totalorder %s91, %s94
      %p103 = scmp.eq.s32.totalorder %s18, 1
      %p104 = por %p102, %p103
      %p105 = scmp.ne.s32.totalorder %s94, %s95
      %p106 = scmp.eq.s32.totalorder %s18, 0
      %p107 = por %p105, %p106
      %p108 = scmp.ne.s32.totalorder %s94, %s95
      %p109 = scmp.eq.s32.totalorder %s19, 1
      %p110 = por %p108, %p109
      %p112 = scmp.ne.s32.totalorder %s95, %s111
      %p113 = scmp.eq.s32.totalorder %s19, 0
      %p114 = por %p112, %p113
      %p115 = scmp.le.s32.totalorder 1, %s13
      %p116 = scmp.lt.s32.totalorder %s13, 3
      %p117 = pnand %p115, %p116
      %p118 = pneg %p117
      // Predicated region
      $region9: #{dumb_linear.1} parent=5 // pred_check
        _
      $region10: #{dumb_linear.1} parent=5 // pred_check_branch
        %120 = sbr.rel (%p117) target = $region12
      $region11: #{dumb_linear.1} parent=5 // pred_region
        %s121 = ssub.s32 %s13, 1
        // Predicated region
        $region13: #{dumb_linear.1} parent=11 // pred_check
          %p122 = pneg %p34
        $region14: #{dumb_linear.1} parent=11 // pred_check_branch
          %124 = sbr.rel (%p122) target = $region16
        $region15: #{dumb_linear.1} parent=11 // pred_region
          _
        $region16: #{dumb_linear.1} parent=11 // pred_fallthru
          _
        // Predicated region
        $region17: #{dumb_linear.1} parent=11 // pred_check
          %p125 = pneg %p55
        $region18: #{dumb_linear.1} parent=11 // pred_check_branch
          %127 = sbr.rel (%p125) target = $region20
        $region19: #{dumb_linear.1} parent=11 // pred_region
          _
        $region20: #{dumb_linear.1} parent=11 // pred_fallthru
          _
      $region12: #{dumb_linear.1} parent=5 // pred_fallthru
        _
      %p128 = scmp.lt.s32.totalorder %s13, 2
      // Predicated region
      $region21: #{dumb_linear.1} parent=5 // pred_check
        %p129 = pneg %p128
      $region22: #{dumb_linear.1} parent=5 // pred_check_branch
        %131 = sbr.rel (%p129) target = $region24
      $region23: #{dumb_linear.1} parent=5 // pred_region
        // Predicated region
        $region25: #{dumb_linear.1} parent=23 // pred_check
          %p132 = pneg %p75
        $region26: #{dumb_linear.1} parent=23 // pred_check_branch
          %134 = sbr.rel (%p132) target = $region28
        $region27: #{dumb_linear.1} parent=23 // pred_region
          %p135 = scmp.lt.s32.totalorder %s13, 1
          %s136 = scalar_select %p135, %s13, 1
          %s137 = smul.addr %s136, 2
          %s138 = smul.addr %s137, 8
          %s139 = scalar_lea.vmem %s2, %s138
        $region28: #{dumb_linear.1} parent=23 // pred_fallthru
          _
      $region24: #{dumb_linear.1} parent=5 // pred_fallthru
        _
      %p140 = scmp.le.s32.totalorder 1, %s13
      %p141 = scmp.lt.s32.totalorder %s13, 3
      %p142 = pnand %p140, %p141
      %p143 = pneg %p142
      // Predicated region
      $region29: #{dumb_linear.1} parent=5 // pred_check
        _
      $region30: #{dumb_linear.1} parent=5 // pred_check_branch
        %145 = sbr.rel (%p142) target = $region32
      $region31: #{dumb_linear.1} parent=5 // pred_region
        %s146 = ssub.s32 %s13, 1
        %p147 = pneg %p34
        %p148 = pneg %p31
        %p149 = pneg %p55
        %p150 = pneg %p52
        %p151 = scmp.lt.s32.totalorder %s18, 1
        %s152 = scalar_select %p151, %s18, 1
        %s153 = smul.addr %s152, 2
        %s154 = smul.addr %s153, 8
        %s155 = scalar_lea.vmem %s2, %s154
        %p156 = pneg %p81
        %p157 = pneg %p78
        %p158 = pneg %p107
        %p159 = pneg %p104
        %s160 = sand.u32 %s94, 1
        %s161 = scalar_lea.sflag [#allocation4], %s160
        %s162 = sand.u32 %s94, 1
        %s163 = smul.addr %s162, 8
        %s164 = scalar_lea.vmem [#allocation3], %s163
        %p165 = scmp.lt.s32.totalorder %s18, 1
        %s166 = scalar_select %p165, %s18, 1
        %s167 = smul.addr %s166, 2
        %s168 = smul.addr %s167, 8
        %s169 = scalar_lea.vmem %s2, %s168
        %v170 = vld [vmem:[%s169] sm:$0xff]
        %v171 = vld [vmem:[%s169 + $0x8] sm:$0xff]
        %v172 = vld [vmem:[%s1] sm:$0xff]
        %v173 = vld [vmem:[%s1 + $0x8] sm:$0xff]
        %v174 = vld [vmem:[%s1 + $0x10] sm:$0xff]
        %v175 = vld [vmem:[%s1 + $0x18] sm:$0xff]
        %v176 = vld [vmem:[%s1 + $0x20] sm:$0xff]
        %v177 = vld [vmem:[%s1 + $0x28] sm:$0xff]
        %v178 = vld [vmem:[%s1 + $0x30] sm:$0xff]
        %v179 = vld [vmem:[%s1 + $0x38] sm:$0xff]
        %v180 = vld [vmem:[%s1 + $0x40] sm:$0xff]
        %v181 = vld [vmem:[%s1 + $0x48] sm:$0xff]
        %v182 = vld [vmem:[%s1 + $0x50] sm:$0xff]
        %v183 = vld [vmem:[%s1 + $0x58] sm:$0xff]
        %v184 = vld [vmem:[%s1 + $0x60] sm:$0xff]
        %v185 = vld [vmem:[%s1 + $0x68] sm:$0xff]
        %v186 = vld [vmem:[%s1 + $0x70] sm:$0xff]
        %v187 = vld [vmem:[%s1 + $0x78] sm:$0xff]
        %v188 = vld [vmem:[%s1 + $0x80] sm:$0xff]
        %v189 = vld [vmem:[%s1 + $0x88] sm:$0xff]
        %v190 = vld [vmem:[%s1 + $0x90] sm:$0xff]
        %v191 = vld [vmem:[%s1 + $0x98] sm:$0xff]
        %v192 = vld [vmem:[%s1 + $0xa0] sm:$0xff]
        %v193 = vld [vmem:[%s1 + $0xa8] sm:$0xff]
        %v194 = vld [vmem:[%s1 + $0xb0] sm:$0xff]
        %v195 = vld [vmem:[%s1 + $0xb8] sm:$0xff]
        %v196 = vld [vmem:[%s1 + $0xc0] sm:$0xff]
        %v197 = vld [vmem:[%s1 + $0xc8] sm:$0xff]
        %v198 = vld [vmem:[%s1 + $0xd0] sm:$0xff]
        %v199 = vld [vmem:[%s1 + $0xd8] sm:$0xff]
        %v200 = vld [vmem:[%s1 + $0xe0] sm:$0xff]
        %v201 = vld [vmem:[%s1 + $0xe8] sm:$0xff]
        %v202 = vld [vmem:[%s1 + $0xf0] sm:$0xff]
        %v203 = vld [vmem:[%s1 + $0xf8] sm:$0xff]
        %s204 = sld [smem:[#allocation2]]
        %v205 = vstv %s204
        %206 = vmatprep.subr.mxu0 0.0
        %v207 = vand.u32 %v172, 4294901760
        %208 = vmatpush1.msra.mxu0 %v207
        %209 = vmatprep.subr.mxu0 0.0
        %v210 = vand.u32 %v173, 4294901760
        %211 = vmatpush1.msra.mxu0 %v210
        %212 = vmatprep.subr.mxu0 0.0
        %v213 = vand.u32 %v174, 4294901760
        %214 = vmatpush1.msra.mxu0 %v213
        %215 = vmatprep.subr.mxu0 0.0
        %v216 = vand.u32 %v175, 4294901760
        %217 = vmatpush1.msra.mxu0 %v216
        %218 = vmatprep.subr.mxu0 0.0
        %v219 = vand.u32 %v176, 4294901760
        %220 = vmatpush1.msra.mxu0 %v219
        %221 = vmatprep.subr.mxu0 0.0
        %v222 = vand.u32 %v177, 4294901760
        %223 = vmatpush1.msra.mxu0 %v222
        %224 = vmatprep.subr.mxu0 0.0
        %v225 = vand.u32 %v178, 4294901760
        %226 = vmatpush1.msra.mxu0 %v225
        %227 = vmatprep.subr.mxu0 0.0
        %v228 = vand.u32 %v179, 4294901760
        %229 = vmatpush1.msra.mxu0 %v228
        %230 = vmatprep.subr.mxu0 0.0
        %v231 = vand.u32 %v180, 4294901760
        %232 = vmatpush1.msra.mxu0 %v231
        %233 = vmatprep.subr.mxu0 0.0
        %v234 = vand.u32 %v181, 4294901760
        %235 = vmatpush1.msra.mxu0 %v234
        %236 = vmatprep.subr.mxu0 0.0
        %v237 = vand.u32 %v182, 4294901760
        %238 = vmatpush1.msra.mxu0 %v237
        %239 = vmatprep.subr.mxu0 0.0
        %v240 = vand.u32 %v183, 4294901760
        %241 = vmatpush1.msra.mxu0 %v240
        %242 = vmatprep.subr.mxu0 0.0
        %v243 = vand.u32 %v184, 4294901760
        %244 = vmatpush1.msra.mxu0 %v243
        %245 = vmatprep.subr.mxu0 0.0
        %v246 = vand.u32 %v185, 4294901760
        %247 = vmatpush1.msra.mxu0 %v246
        %248 = vmatprep.subr.mxu0 0.0
        %v249 = vand.u32 %v186, 4294901760
        %250 = vmatpush1.msra.mxu0 %v249
        %251 = vmatprep.subr.mxu0 0.0
        %v252 = vand.u32 %v187, 4294901760
        %253 = vmatpush1.msra.mxu0 %v252
        %254 = vmatprep.subr.mxu0 0.0
        %v255 = vand.u32 %v188, 4294901760
        %256 = vmatpush1.msra.mxu0 %v255
        %257 = vmatprep.subr.mxu0 0.0
        %v258 = vand.u32 %v189, 4294901760
        %259 = vmatpush1.msra.mxu0 %v258
        %260 = vmatprep.subr.mxu0 0.0
        %v261 = vand.u32 %v190, 4294901760
        %262 = vmatpush1.msra.mxu0 %v261
        %263 = vmatprep.subr.mxu0 0.0
        %v264 = vand.u32 %v191, 4294901760
        %265 = vmatpush1.msra.mxu0 %v264
        %266 = vmatprep.subr.mxu0 0.0
        %v267 = vand.u32 %v192, 4294901760
        %268 = vmatpush1.msra.mxu0 %v267
        %269 = vmatprep.subr.mxu0 0.0
        %v270 = vand.u32 %v193, 4294901760
        %271 = vmatpush1.msra.mxu0 %v270
        %272 = vmatprep.subr.mxu0 0.0
        %v273 = vand.u32 %v194, 4294901760
        %274 = vmatpush1.msra.mxu0 %v273
        %275 = vmatprep.subr.mxu0 0.0
        %v276 = vand.u32 %v195, 4294901760
        %277 = vmatpush1.msra.mxu0 %v276
        %278 = vmatprep.subr.mxu0 0.0
        %v279 = vand.u32 %v196, 4294901760
        %280 = vmatpush1.msra.mxu0 %v279
        %281 = vmatprep.subr.mxu0 0.0
        %v282 = vand.u32 %v197, 4294901760
        %283 = vmatpush1.msra.mxu0 %v282
        %284 = vmatprep.subr.mxu0 0.0
        %v285 = vand.u32 %v198, 4294901760
        %286 = vmatpush1.msra.mxu0 %v285
        %287 = vmatprep.subr.mxu0 0.0
        %v288 = vand.u32 %v199, 4294901760
        %289 = vmatpush1.msra.mxu0 %v288
        %290 = vmatprep.subr.mxu0 0.0
        %v291 = vand.u32 %v200, 4294901760
        %292 = vmatpush1.msra.mxu0 %v291
        %293 = vmatprep.subr.mxu0 0.0
        %v294 = vand.u32 %v201, 4294901760
        %295 = vmatpush1.msra.mxu0 %v294
        %296 = vmatprep.subr.mxu0 0.0
        %v297 = vand.u32 %v202, 4294901760
        %298 = vmatpush1.msra.mxu0 %v297
        %299 = vmatprep.subr.mxu0 0.0
        %v300 = vand.u32 %v203, 4294901760
        %301 = vmatpush1.msra.mxu0 %v300
        %v302 = vand.u32 %v171, 4294901760
        %v303 = vsub.f32 %v171, %v302
        %v304 = vand.u32 %v303, 4294901760
        %v305 = vsub.f32 %v303, %v304
        %v306 = vand.u32 %v305, 4294901760
        %307 = vmatprep.mubr.f32.mxu0 %v306
        %v308 = vand.u32 %v170, 4294901760
        %v309 = vsub.f32 %v170, %v308
        %v310 = vand.u32 %v309, 4294901760
        %v311 = vsub.f32 %v309, %v310
        %v312 = vand.u32 %v311, 4294901760
        %313 = vmatmul.mubr.f32.gmra.mrb[0].mxu0 %v312
        %v314 = vpop.f32.mrb[0].mxu0
        %v315 = vadd.f32 %v205, %v314
        %v316 = vpop.f32.mrb[0].mxu0
        %317 = vdwg.mxu0
        %318 = vmatprep.subr.mxu0 0.0
        %v319 = vand.u32 %v172, 4294901760
        %v320 = vsub.f32 %v172, %v319
        %v321 = vand.u32 %v320, 4294901760
        %v322 = vsub.f32 %v320, %v321
        %v323 = vand.u32 %v322, 4294901760
        %324 = vmatpush1.msra.mxu0 %v323
        %325 = vmatprep.subr.mxu0 0.0
        %v326 = vand.u32 %v173, 4294901760
        %v327 = vsub.f32 %v173, %v326
        %v328 = vand.u32 %v327, 4294901760
        %v329 = vsub.f32 %v327, %v328
        %v330 = vand.u32 %v329, 4294901760
        %331 = vmatpush1.msra.mxu0 %v330
        %332 = vmatprep.subr.mxu0 0.0
        %v333 = vand.u32 %v174, 4294901760
        %v334 = vsub.f32 %v174, %v333
        %v335 = vand.u32 %v334, 4294901760
        %v336 = vsub.f32 %v334, %v335
        %v337 = vand.u32 %v336, 4294901760
        %338 = vmatpush1.msra.mxu0 %v337
        %339 = vmatprep.subr.mxu0 0.0
        %v340 = vand.u32 %v175, 4294901760
        %v341 = vsub.f32 %v175, %v340
        %v342 = vand.u32 %v341, 4294901760
        %v343 = vsub.f32 %v341, %v342
        %v344 = vand.u32 %v343, 4294901760
        %345 = vmatpush1.msra.mxu0 %v344
        %346 = vmatprep.subr.mxu0 0.0
        %v347 = vand.u32 %v176, 4294901760
        %v348 = vsub.f32 %v176, %v347
        %v349 = vand.u32 %v348, 4294901760
        %v350 = vsub.f32 %v348, %v349
        %v351 = vand.u32 %v350, 4294901760
        %352 = vmatpush1.msra.mxu0 %v351
        %353 = vmatprep.subr.mxu0 0.0
        %v354 = vand.u32 %v177, 4294901760
        %v355 = vsub.f32 %v177, %v354
        %v356 = vand.u32 %v355, 4294901760
        %v357 = vsub.f32 %v355, %v356
        %v358 = vand.u32 %v357, 4294901760
        %359 = vmatpush1.msra.mxu0 %v358
        %360 = vmatprep.subr.mxu0 0.0
        %v361 = vand.u32 %v178, 4294901760
        %v362 = vsub.f32 %v178, %v361
        %v363 = vand.u32 %v362, 4294901760
        %v364 = vsub.f32 %v362, %v363
        %v365 = vand.u32 %v364, 4294901760
        %366 = vmatpush1.msra.mxu0 %v365
        %367 = vmatprep.subr.mxu0 0.0
        %v368 = vand.u32 %v179, 4294901760
        %v369 = vsub.f32 %v179, %v368
        %v370 = vand.u32 %v369, 4294901760
        %v371 = vsub.f32 %v369, %v370
        %v372 = vand.u32 %v371, 4294901760
        %373 = vmatpush1.msra.mxu0 %v372
        %374 = vmatprep.subr.mxu0 0.0
        %v375 = vand.u32 %v180, 4294901760
        %v376 = vsub.f32 %v180, %v375
        %v377 = vand.u32 %v376, 4294901760
        %v378 = vsub.f32 %v376, %v377
        %v379 = vand.u32 %v378, 4294901760
        %380 = vmatpush1.msra.mxu0 %v379
        %381 = vmatprep.subr.mxu0 0.0
        %v382 = vand.u32 %v181, 4294901760
        %v383 = vsub.f32 %v181, %v382
        %v384 = vand.u32 %v383, 4294901760
        %v385 = vsub.f32 %v383, %v384
        %v386 = vand.u32 %v385, 4294901760
        %387 = vmatpush1.msra.mxu0 %v386
        %388 = vmatprep.subr.mxu0 0.0
        %v389 = vand.u32 %v182, 4294901760
        %v390 = vsub.f32 %v182, %v389
        %v391 = vand.u32 %v390, 4294901760
        %v392 = vsub.f32 %v390, %v391
        %v393 = vand.u32 %v392, 4294901760
        %394 = vmatpush1.msra.mxu0 %v393
        %395 = vmatprep.subr.mxu0 0.0
        %v396 = vand.u32 %v183, 4294901760
        %v397 = vsub.f32 %v183, %v396
        %v398 = vand.u32 %v397, 4294901760
        %v399 = vsub.f32 %v397, %v398
        %v400 = vand.u32 %v399, 4294901760
        %401 = vmatpush1.msra.mxu0 %v400
        %402 = vmatprep.subr.mxu0 0.0
        %v403 = vand.u32 %v184, 4294901760
        %v404 = vsub.f32 %v184, %v403
        %v405 = vand.u32 %v404, 4294901760
        %v406 = vsub.f32 %v404, %v405
        %v407 = vand.u32 %v406, 4294901760
        %408 = vmatpush1.msra.mxu0 %v407
        %409 = vmatprep.subr.mxu0 0.0
        %v410 = vand.u32 %v185, 4294901760
        %v411 = vsub.f32 %v185, %v410
        %v412 = vand.u32 %v411, 4294901760
        %v413 = vsub.f32 %v411, %v412
        %v414 = vand.u32 %v413, 4294901760
        %415 = vmatpush1.msra.mxu0 %v414
        %416 = vmatprep.subr.mxu0 0.0
        %v417 = vand.u32 %v186, 4294901760
        %v418 = vsub.f32 %v186, %v417
        %v419 = vand.u32 %v418, 4294901760
        %v420 = vsub.f32 %v418, %v419
        %v421 = vand.u32 %v420, 4294901760
        %422 = vmatpush1.msra.mxu0 %v421
        %423 = vmatprep.subr.mxu0 0.0
        %v424 = vand.u32 %v187, 4294901760
        %v425 = vsub.f32 %v187, %v424
        %v426 = vand.u32 %v425, 4294901760
        %v427 = vsub.f32 %v425, %v426
        %v428 = vand.u32 %v427, 4294901760
        %429 = vmatpush1.msra.mxu0 %v428
        %430 = vmatprep.subr.mxu0 0.0
        %v431 = vand.u32 %v188, 4294901760
        %v432 = vsub.f32 %v188, %v431
        %v433 = vand.u32 %v432, 4294901760
        %v434 = vsub.f32 %v432, %v433
        %v435 = vand.u32 %v434, 4294901760
        %436 = vmatpush1.msra.mxu0 %v435
        %437 = vmatprep.subr.mxu0 0.0
        %v438 = vand.u32 %v189, 4294901760
        %v439 = vsub.f32 %v189, %v438
        %v440 = vand.u32 %v439, 4294901760
        %v441 = vsub.f32 %v439, %v440
        %v442 = vand.u32 %v441, 4294901760
        %443 = vmatpush1.msra.mxu0 %v442
        %444 = vmatprep.subr.mxu0 0.0
        %v445 = vand.u32 %v190, 4294901760
        %v446 = vsub.f32 %v190, %v445
        %v447 = vand.u32 %v446, 4294901760
        %v448 = vsub.f32 %v446, %v447
        %v449 = vand.u32 %v448, 4294901760
        %450 = vmatpush1.msra.mxu0 %v449
        %451 = vmatprep.subr.mxu0 0.0
        %v452 = vand.u32 %v191, 4294901760
        %v453 = vsub.f32 %v191, %v452
        %v454 = vand.u32 %v453, 4294901760
        %v455 = vsub.f32 %v453, %v454
        %v456 = vand.u32 %v455, 4294901760
        %457 = vmatpush1.msra.mxu0 %v456
        %458 = vmatprep.subr.mxu0 0.0
        %v459 = vand.u32 %v192, 4294901760
        %v460 = vsub.f32 %v192, %v459
        %v461 = vand.u32 %v460, 4294901760
        %v462 = vsub.f32 %v460, %v461
        %v463 = vand.u32 %v462, 4294901760
        %464 = vmatpush1.msra.mxu0 %v463
        %465 = vmatprep.subr.mxu0 0.0
        %v466 = vand.u32 %v193, 4294901760
        %v467 = vsub.f32 %v193, %v466
        %v468 = vand.u32 %v467, 4294901760
        %v469 = vsub.f32 %v467, %v468
        %v470 = vand.u32 %v469, 4294901760
        %471 = vmatpush1.msra.mxu0 %v470
        %472 = vmatprep.subr.mxu0 0.0
        %v473 = vand.u32 %v194, 4294901760
        %v474 = vsub.f32 %v194, %v473
        %v475 = vand.u32 %v474, 4294901760
        %v476 = vsub.f32 %v474, %v475
        %v477 = vand.u32 %v476, 4294901760
        %478 = vmatpush1.msra.mxu0 %v477
        %479 = vmatprep.subr.mxu0 0.0
        %v480 = vand.u32 %v195, 4294901760
        %v481 = vsub.f32 %v195, %v480
        %v482 = vand.u32 %v481, 4294901760
        %v483 = vsub.f32 %v481, %v482
        %v484 = vand.u32 %v483, 4294901760
        %485 = vmatpush1.msra.mxu0 %v484
        %486 = vmatprep.subr.mxu0 0.0
        %v487 = vand.u32 %v196, 4294901760
        %v488 = vsub.f32 %v196, %v487
        %v489 = vand.u32 %v488, 4294901760
        %v490 = vsub.f32 %v488, %v489
        %v491 = vand.u32 %v490, 4294901760
        %492 = vmatpush1.msra.mxu0 %v491
        %493 = vmatprep.subr.mxu0 0.0
        %v494 = vand.u32 %v197, 4294901760
        %v495 = vsub.f32 %v197, %v494
        %v496 = vand.u32 %v495, 4294901760
        %v497 = vsub.f32 %v495, %v496
        %v498 = vand.u32 %v497, 4294901760
        %499 = vmatpush1.msra.mxu0 %v498
        %500 = vmatprep.subr.mxu0 0.0
        %v501 = vand.u32 %v198, 4294901760
        %v502 = vsub.f32 %v198, %v501
        %v503 = vand.u32 %v502, 4294901760
        %v504 = vsub.f32 %v502, %v503
        %v505 = vand.u32 %v504, 4294901760
        %506 = vmatpush1.msra.mxu0 %v505
        %507 = vmatprep.subr.mxu0 0.0
        %v508 = vand.u32 %v199, 4294901760
        %v509 = vsub.f32 %v199, %v508
        %v510 = vand.u32 %v509, 4294901760
        %v511 = vsub.f32 %v509, %v510
        %v512 = vand.u32 %v511, 4294901760
        %513 = vmatpush1.msra.mxu0 %v512
        %514 = vmatprep.subr.mxu0 0.0
        %v515 = vand.u32 %v200, 4294901760
        %v516 = vsub.f32 %v200, %v515
        %v517 = vand.u32 %v516, 4294901760
        %v518 = vsub.f32 %v516, %v517
        %v519 = vand.u32 %v518, 4294901760
        %520 = vmatpush1.msra.mxu0 %v519
        %521 = vmatprep.subr.mxu0 0.0
        %v522 = vand.u32 %v201, 4294901760
        %v523 = vsub.f32 %v201, %v522
        %v524 = vand.u32 %v523, 4294901760
        %v525 = vsub.f32 %v523, %v524
        %v526 = vand.u32 %v525, 4294901760
        %527 = vmatpush1.msra.mxu0 %v526
        %528 = vmatprep.subr.mxu0 0.0
        %v529 = vand.u32 %v202, 4294901760
        %v530 = vsub.f32 %v202, %v529
        %v531 = vand.u32 %v530, 4294901760
        %v532 = vsub.f32 %v530, %v531
        %v533 = vand.u32 %v532, 4294901760
        %534 = vmatpush1.msra.mxu0 %v533
        %535 = vmatprep.subr.mxu0 0.0
        %v536 = vand.u32 %v203, 4294901760
        %v537 = vsub.f32 %v203, %v536
        %v538 = vand.u32 %v537, 4294901760
        %v539 = vsub.f32 %v537, %v538
        %v540 = vand.u32 %v539, 4294901760
        %541 = vmatpush1.msra.mxu0 %v540
        %v542 = vand.u32 %v171, 4294901760
        %543 = vmatprep.mubr.f32.mxu0 %v542
        %v544 = vand.u32 %v170, 4294901760
        %545 = vmatmul.mubr.f32.gmra.mrb[0].mxu0 %v544
        %v546 = vpop.f32.mrb[0].mxu0
        %v547 = vadd.f32 %v315, %v546
        %v548 = vpop.f32.mrb[0].mxu0
        %549 = vdwg.mxu0
        %550 = vmatprep.subr.mxu0 0.0
        %v551 = vand.u32 %v172, 4294901760
        %v552 = vsub.f32 %v172, %v551
        %553 = vmatpush1.msra.mxu0 %v552
        %554 = vmatprep.subr.mxu0 0.0
        %v555 = vand.u32 %v173, 4294901760
        %v556 = vsub.f32 %v173, %v555
        %557 = vmatpush1.msra.mxu0 %v556
        %558 = vmatprep.subr.mxu0 0.0
        %v559 = vand.u32 %v174, 4294901760
        %v560 = vsub.f32 %v174, %v559
        %561 = vmatpush1.msra.mxu0 %v560
        %562 = vmatprep.subr.mxu0 0.0
        %v563 = vand.u32 %v175, 4294901760
        %v564 = vsub.f32 %v175, %v563
        %565 = vmatpush1.msra.mxu0 %v564
        %566 = vmatprep.subr.mxu0 0.0
        %v567 = vand.u32 %v176, 4294901760
        %v568 = vsub.f32 %v176, %v567
        %569 = vmatpush1.msra.mxu0 %v568
        %570 = vmatprep.subr.mxu0 0.0
        %v571 = vand.u32 %v177, 4294901760
        %v572 = vsub.f32 %v177, %v571
        %573 = vmatpush1.msra.mxu0 %v572
        %574 = vmatprep.subr.mxu0 0.0
        %v575 = vand.u32 %v178, 4294901760
        %v576 = vsub.f32 %v178, %v575
        %577 = vmatpush1.msra.mxu0 %v576
        %578 = vmatprep.subr.mxu0 0.0
        %v579 = vand.u32 %v179, 4294901760
        %v580 = vsub.f32 %v179, %v579
        %581 = vmatpush1.msra.mxu0 %v580
        %582 = vmatprep.subr.mxu0 0.0
        %v583 = vand.u32 %v180, 4294901760
        %v584 = vsub.f32 %v180, %v583
        %585 = vmatpush1.msra.mxu0 %v584
        %586 = vmatprep.subr.mxu0 0.0
        %v587 = vand.u32 %v181, 4294901760
        %v588 = vsub.f32 %v181, %v587
        %589 = vmatpush1.msra.mxu0 %v588
        %590 = vmatprep.subr.mxu0 0.0
        %v591 = vand.u32 %v182, 4294901760
        %v592 = vsub.f32 %v182, %v591
        %593 = vmatpush1.msra.mxu0 %v592
        %594 = vmatprep.subr.mxu0 0.0
        %v595 = vand.u32 %v183, 4294901760
        %v596 = vsub.f32 %v183, %v595
        %597 = vmatpush1.msra.mxu0 %v596
        %598 = vmatprep.subr.mxu0 0.0
        %v599 = vand.u32 %v184, 4294901760
        %v600 = vsub.f32 %v184, %v599
        %601 = vmatpush1.msra.mxu0 %v600
        %602 = vmatprep.subr.mxu0 0.0
        %v603 = vand.u32 %v185, 4294901760
        %v604 = vsub.f32 %v185, %v603
        %605 = vmatpush1.msra.mxu0 %v604
        %606 = vmatprep.subr.mxu0 0.0
        %v607 = vand.u32 %v186, 4294901760
        %v608 = vsub.f32 %v186, %v607
        %609 = vmatpush1.msra.mxu0 %v608
        %610 = vmatprep.subr.mxu0 0.0
        %v611 = vand.u32 %v187, 4294901760
        %v612 = vsub.f32 %v187, %v611
        %613 = vmatpush1.msra.mxu0 %v612
        %614 = vmatprep.subr.mxu0 0.0
        %v615 = vand.u32 %v188, 4294901760
        %v616 = vsub.f32 %v188, %v615
        %617 = vmatpush1.msra.mxu0 %v616
        %618 = vmatprep.subr.mxu0 0.0
        %v619 = vand.u32 %v189, 4294901760
        %v620 = vsub.f32 %v189, %v619
        %621 = vmatpush1.msra.mxu0 %v620
        %622 = vmatprep.subr.mxu0 0.0
        %v623 = vand.u32 %v190, 4294901760
        %v624 = vsub.f32 %v190, %v623
        %625 = vmatpush1.msra.mxu0 %v624
        %626 = vmatprep.subr.mxu0 0.0
        %v627 = vand.u32 %v191, 4294901760
        %v628 = vsub.f32 %v191, %v627
        %629 = vmatpush1.msra.mxu0 %v628
        %630 = vmatprep.subr.mxu0 0.0
        %v631 = vand.u32 %v192, 4294901760
        %v632 = vsub.f32 %v192, %v631
        %633 = vmatpush1.msra.mxu0 %v632
        %634 = vmatprep.subr.mxu0 0.0
        %v635 = vand.u32 %v193, 4294901760
        %v636 = vsub.f32 %v193, %v635
        %637 = vmatpush1.msra.mxu0 %v636
        %638 = vmatprep.subr.mxu0 0.0
        %v639 = vand.u32 %v194, 4294901760
        %v640 = vsub.f32 %v194, %v639
        %641 = vmatpush1.msra.mxu0 %v640
        %642 = vmatprep.subr.mxu0 0.0
        %v643 = vand.u32 %v195, 4294901760
        %v644 = vsub.f32 %v195, %v643
        %645 = vmatpush1.msra.mxu0 %v644
        %646 = vmatprep.subr.mxu0 0.0
        %v647 = vand.u32 %v196, 4294901760
        %v648 = vsub.f32 %v196, %v647
        %649 = vmatpush1.msra.mxu0 %v648
        %650 = vmatprep.subr.mxu0 0.0
        %v651 = vand.u32 %v197, 4294901760
        %v652 = vsub.f32 %v197, %v651
        %653 = vmatpush1.msra.mxu0 %v652
        %654 = vmatprep.subr.mxu0 0.0
        %v655 = vand.u32 %v198, 4294901760
        %v656 = vsub.f32 %v198, %v655
        %657 = vmatpush1.msra.mxu0 %v656
        %658 = vmatprep.subr.mxu0 0.0
        %v659 = vand.u32 %v199, 4294901760
        %v660 = vsub.f32 %v199, %v659
        %661 = vmatpush1.msra.mxu0 %v660
        %662 = vmatprep.subr.mxu0 0.0
        %v663 = vand.u32 %v200, 4294901760
        %v664 = vsub.f32 %v200, %v663
        %665 = vmatpush1.msra.mxu0 %v664
        %666 = vmatprep.subr.mxu0 0.0
        %v667 = vand.u32 %v201, 4294901760
        %v668 = vsub.f32 %v201, %v667
        %669 = vmatpush1.msra.mxu0 %v668
        %670 = vmatprep.subr.mxu0 0.0
        %v671 = vand.u32 %v202, 4294901760
        %v672 = vsub.f32 %v202, %v671
        %673 = vmatpush1.msra.mxu0 %v672
        %674 = vmatprep.subr.mxu0 0.0
        %v675 = vand.u32 %v203, 4294901760
        %v676 = vsub.f32 %v203, %v675
        %677 = vmatpush1.msra.mxu0 %v676
        %v678 = vand.u32 %v171, 4294901760
        %v679 = vsub.f32 %v171, %v678
        %680 = vmatprep.mubr.f32.mxu0 %v679
        %v681 = vand.u32 %v170, 4294901760
        %v682 = vsub.f32 %v170, %v681
        %683 = vmatmul.mubr.f32.gmra.mrb[0].mxu0 %v682
        %v684 = vpop.f32.mrb[0].mxu0
        %v685 = vadd.f32 %v547, %v684
        %v686 = vpop.f32.mrb[0].mxu0
        %687 = vdwg.mxu0
        %688 = vmatprep.subr.mxu0 0.0
        %v689 = vand.u32 %v172, 4294901760
        %690 = vmatpush1.msra.mxu0 %v689
        %691 = vmatprep.subr.mxu0 0.0
        %v692 = vand.u32 %v173, 4294901760
        %693 = vmatpush1.msra.mxu0 %v692
        %694 = vmatprep.subr.mxu0 0.0
        %v695 = vand.u32 %v174, 4294901760
        %696 = vmatpush1.msra.mxu0 %v695
        %697 = vmatprep.subr.mxu0 0.0
        %v698 = vand.u32 %v175, 4294901760
        %699 = vmatpush1.msra.mxu0 %v698
        %700 = vmatprep.subr.mxu0 0.0
        %v701 = vand.u32 %v176, 4294901760
        %702 = vmatpush1.msra.mxu0 %v701
        %703 = vmatprep.subr.mxu0 0.0
        %v704 = vand.u32 %v177, 4294901760
        %705 = vmatpush1.msra.mxu0 %v704
        %706 = vmatprep.subr.mxu0 0.0
        %v707 = vand.u32 %v178, 4294901760
        %708 = vmatpush1.msra.mxu0 %v707
        %709 = vmatprep.subr.mxu0 0.0
        %v710 = vand.u32 %v179, 4294901760
        %711 = vmatpush1.msra.mxu0 %v710
        %712 = vmatprep.subr.mxu0 0.0
        %v713 = vand.u32 %v180, 4294901760
        %714 = vmatpush1.msra.mxu0 %v713
        %715 = vmatprep.subr.mxu0 0.0
        %v716 = vand.u32 %v181, 4294901760
        %717 = vmatpush1.msra.mxu0 %v716
        %718 = vmatprep.subr.mxu0 0.0
        %v719 = vand.u32 %v182, 4294901760
        %720 = vmatpush1.msra.mxu0 %v719
        %721 = vmatprep.subr.mxu0 0.0
        %v722 = vand.u32 %v183, 4294901760
        %723 = vmatpush1.msra.mxu0 %v722
        %724 = vmatprep.subr.mxu0 0.0
        %v725 = vand.u32 %v184, 4294901760
        %726 = vmatpush1.msra.mxu0 %v725
        %727 = vmatprep.subr.mxu0 0.0
        %v728 = vand.u32 %v185, 4294901760
        %729 = vmatpush1.msra.mxu0 %v728
        %730 = vmatprep.subr.mxu0 0.0
        %v731 = vand.u32 %v186, 4294901760
        %732 = vmatpush1.msra.mxu0 %v731
        %733 = vmatprep.subr.mxu0 0.0
        %v734 = vand.u32 %v187, 4294901760
        %735 = vmatpush1.msra.mxu0 %v734
        %736 = vmatprep.subr.mxu0 0.0
        %v737 = vand.u32 %v188, 4294901760
        %738 = vmatpush1.msra.mxu0 %v737
        %739 = vmatprep.subr.mxu0 0.0
        %v740 = vand.u32 %v189, 4294901760
        %741 = vmatpush1.msra.mxu0 %v740
        %742 = vmatprep.subr.mxu0 0.0
        %v743 = vand.u32 %v190, 4294901760
        %744 = vmatpush1.msra.mxu0 %v743
        %745 = vmatprep.subr.mxu0 0.0
        %v746 = vand.u32 %v191, 4294901760
        %747 = vmatpush1.msra.mxu0 %v746
        %748 = vmatprep.subr.mxu0 0.0
        %v749 = vand.u32 %v192, 4294901760
        %750 = vmatpush1.msra.mxu0 %v749
        %751 = vmatprep.subr.mxu0 0.0
        %v752 = vand.u32 %v193, 4294901760
        %753 = vmatpush1.msra.mxu0 %v752
        %754 = vmatprep.subr.mxu0 0.0
        %v755 = vand.u32 %v194, 4294901760
        %756 = vmatpush1.msra.mxu0 %v755
        %757 = vmatprep.subr.mxu0 0.0
        %v758 = vand.u32 %v195, 4294901760
        %759 = vmatpush1.msra.mxu0 %v758
        %760 = vmatprep.subr.mxu0 0.0
        %v761 = vand.u32 %v196, 4294901760
        %762 = vmatpush1.msra.mxu0 %v761
        %763 = vmatprep.subr.mxu0 0.0
        %v764 = vand.u32 %v197, 4294901760
        %765 = vmatpush1.msra.mxu0 %v764
        %766 = vmatprep.subr.mxu0 0.0
        %v767 = vand.u32 %v198, 4294901760
        %768 = vmatpush1.msra.mxu0 %v767
        %769 = vmatprep.subr.mxu0 0.0
        %v770 = vand.u32 %v199, 4294901760
        %771 = vmatpush1.msra.mxu0 %v770
        %772 = vmatprep.subr.mxu0 0.0
        %v773 = vand.u32 %v200, 4294901760
        %774 = vmatpush1.msra.mxu0 %v773
        %775 = vmatprep.subr.mxu0 0.0
        %v776 = vand.u32 %v201, 4294901760
        %777 = vmatpush1.msra.mxu0 %v776
        %778 = vmatprep.subr.mxu0 0.0
        %v779 = vand.u32 %v202, 4294901760
        %780 = vmatpush1.msra.mxu0 %v779
        %781 = vmatprep.subr.mxu0 0.0
        %v782 = vand.u32 %v203, 4294901760
        %783 = vmatpush1.msra.mxu0 %v782
        %v784 = vand.u32 %v171, 4294901760
        %v785 = vsub.f32 %v171, %v784
        %v786 = vand.u32 %v785, 4294901760
        %787 = vmatprep.mubr.f32.mxu0 %v786
        %v788 = vand.u32 %v170, 4294901760
        %v789 = vsub.f32 %v170, %v788
        %v790 = vand.u32 %v789, 4294901760
        %791 = vmatmul.mubr.f32.gmra.mrb[0].mxu0 %v790
        %v792 = vpop.f32.mrb[0].mxu0
        %v793 = vadd.f32 %v685, %v792
        %v794 = vpop.f32.mrb[0].mxu0
        %795 = vdwg.mxu0
        %796 = vmatprep.subr.mxu0 0.0
        %v797 = vand.u32 %v172, 4294901760
        %v798 = vsub.f32 %v172, %v797
        %v799 = vand.u32 %v798, 4294901760
        %800 = vmatpush1.msra.mxu0 %v799
        %801 = vmatprep.subr.mxu0 0.0
        %v802 = vand.u32 %v173, 4294901760
        %v803 = vsub.f32 %v173, %v802
        %v804 = vand.u32 %v803, 4294901760
        %805 = vmatpush1.msra.mxu0 %v804
        %806 = vmatprep.subr.mxu0 0.0
        %v807 = vand.u32 %v174, 4294901760
        %v808 = vsub.f32 %v174, %v807
        %v809 = vand.u32 %v808, 4294901760
        %810 = vmatpush1.msra.mxu0 %v809
        %811 = vmatprep.subr.mxu0 0.0
        %v812 = vand.u32 %v175, 4294901760
        %v813 = vsub.f32 %v175, %v812
        %v814 = vand.u32 %v813, 4294901760
        %815 = vmatpush1.msra.mxu0 %v814
        %816 = vmatprep.subr.mxu0 0.0
        %v817 = vand.u32 %v176, 4294901760
        %v818 = vsub.f32 %v176, %v817
        %v819 = vand.u32 %v818, 4294901760
        %820 = vmatpush1.msra.mxu0 %v819
        %821 = vmatprep.subr.mxu0 0.0
        %v822 = vand.u32 %v177, 4294901760
        %v823 = vsub.f32 %v177, %v822
        %v824 = vand.u32 %v823, 4294901760
        %825 = vmatpush1.msra.mxu0 %v824
        %826 = vmatprep.subr.mxu0 0.0
        %v827 = vand.u32 %v178, 4294901760
        %v828 = vsub.f32 %v178, %v827
        %v829 = vand.u32 %v828, 4294901760
        %830 = vmatpush1.msra.mxu0 %v829
        %831 = vmatprep.subr.mxu0 0.0
        %v832 = vand.u32 %v179, 4294901760
        %v833 = vsub.f32 %v179, %v832
        %v834 = vand.u32 %v833, 4294901760
        %835 = vmatpush1.msra.mxu0 %v834
        %836 = vmatprep.subr.mxu0 0.0
        %v837 = vand.u32 %v180, 4294901760
        %v838 = vsub.f32 %v180, %v837
        %v839 = vand.u32 %v838, 4294901760
        %840 = vmatpush1.msra.mxu0 %v839
        %841 = vmatprep.subr.mxu0 0.0
        %v842 = vand.u32 %v181, 4294901760
        %v843 = vsub.f32 %v181, %v842
        %v844 = vand.u32 %v843, 4294901760
        %845 = vmatpush1.msra.mxu0 %v844
        %846 = vmatprep.subr.mxu0 0.0
        %v847 = vand.u32 %v182, 4294901760
        %v848 = vsub.f32 %v182, %v847
        %v849 = vand.u32 %v848, 4294901760
        %850 = vmatpush1.msra.mxu0 %v849
        %851 = vmatprep.subr.mxu0 0.0
        %v852 = vand.u32 %v183, 4294901760
        %v853 = vsub.f32 %v183, %v852
        %v854 = vand.u32 %v853, 4294901760
        %855 = vmatpush1.msra.mxu0 %v854
        %856 = vmatprep.subr.mxu0 0.0
        %v857 = vand.u32 %v184, 4294901760
        %v858 = vsub.f32 %v184, %v857
        %v859 = vand.u32 %v858, 4294901760
        %860 = vmatpush1.msra.mxu0 %v859
        %861 = vmatprep.subr.mxu0 0.0
        %v862 = vand.u32 %v185, 4294901760
        %v863 = vsub.f32 %v185, %v862
        %v864 = vand.u32 %v863, 4294901760
        %865 = vmatpush1.msra.mxu0 %v864
        %866 = vmatprep.subr.mxu0 0.0
        %v867 = vand.u32 %v186, 4294901760
        %v868 = vsub.f32 %v186, %v867
        %v869 = vand.u32 %v868, 4294901760
        %870 = vmatpush1.msra.mxu0 %v869
        %871 = vmatprep.subr.mxu0 0.0
        %v872 = vand.u32 %v187, 4294901760
        %v873 = vsub.f32 %v187, %v872
        %v874 = vand.u32 %v873, 4294901760
        %875 = vmatpush1.msra.mxu0 %v874
        %876 = vmatprep.subr.mxu0 0.0
        %v877 = vand.u32 %v188, 4294901760
        %v878 = vsub.f32 %v188, %v877
        %v879 = vand.u32 %v878, 4294901760
        %880 = vmatpush1.msra.mxu0 %v879
        %881 = vmatprep.subr.mxu0 0.0
        %v882 = vand.u32 %v189, 4294901760
        %v883 = vsub.f32 %v189, %v882
        %v884 = vand.u32 %v883, 4294901760
        %885 = vmatpush1.msra.mxu0 %v884
        %886 = vmatprep.subr.mxu0 0.0
        %v887 = vand.u32 %v190, 4294901760
        %v888 = vsub.f32 %v190, %v887
        %v889 = vand.u32 %v888, 4294901760
        %890 = vmatpush1.msra.mxu0 %v889
        %891 = vmatprep.subr.mxu0 0.0
        %v892 = vand.u32 %v191, 4294901760
        %v893 = vsub.f32 %v191, %v892
        %v894 = vand.u32 %v893, 4294901760
        %895 = vmatpush1.msra.mxu0 %v894
        %896 = vmatprep.subr.mxu0 0.0
        %v897 = vand.u32 %v192, 4294901760
        %v898 = vsub.f32 %v192, %v897
        %v899 = vand.u32 %v898, 4294901760
        %900 = vmatpush1.msra.mxu0 %v899
        %901 = vmatprep.subr.mxu0 0.0
        %v902 = vand.u32 %v193, 4294901760
        %v903 = vsub.f32 %v193, %v902
        %v904 = vand.u32 %v903, 4294901760
        %905 = vmatpush1.msra.mxu0 %v904
        %906 = vmatprep.subr.mxu0 0.0
        %v907 = vand.u32 %v194, 4294901760
        %v908 = vsub.f32 %v194, %v907
        %v909 = vand.u32 %v908, 4294901760
        %910 = vmatpush1.msra.mxu0 %v909
        %911 = vmatprep.subr.mxu0 0.0
        %v912 = vand.u32 %v195, 4294901760
        %v913 = vsub.f32 %v195, %v912
        %v914 = vand.u32 %v913, 4294901760
        %915 = vmatpush1.msra.mxu0 %v914
        %916 = vmatprep.subr.mxu0 0.0
        %v917 = vand.u32 %v196, 4294901760
        %v918 = vsub.f32 %v196, %v917
        %v919 = vand.u32 %v918, 4294901760
        %920 = vmatpush1.msra.mxu0 %v919
        %921 = vmatprep.subr.mxu0 0.0
        %v922 = vand.u32 %v197, 4294901760
        %v923 = vsub.f32 %v197, %v922
        %v924 = vand.u32 %v923, 4294901760
        %925 = vmatpush1.msra.mxu0 %v924
        %926 = vmatprep.subr.mxu0 0.0
        %v927 = vand.u32 %v198, 4294901760
        %v928 = vsub.f32 %v198, %v927
        %v929 = vand.u32 %v928, 4294901760
        %930 = vmatpush1.msra.mxu0 %v929
        %931 = vmatprep.subr.mxu0 0.0
        %v932 = vand.u32 %v199, 4294901760
        %v933 = vsub.f32 %v199, %v932
        %v934 = vand.u32 %v933, 4294901760
        %935 = vmatpush1.msra.mxu0 %v934
        %936 = vmatprep.subr.mxu0 0.0
        %v937 = vand.u32 %v200, 4294901760
        %v938 = vsub.f32 %v200, %v937
        %v939 = vand.u32 %v938, 4294901760
        %940 = vmatpush1.msra.mxu0 %v939
        %941 = vmatprep.subr.mxu0 0.0
        %v942 = vand.u32 %v201, 4294901760
        %v943 = vsub.f32 %v201, %v942
        %v944 = vand.u32 %v943, 4294901760
        %945 = vmatpush1.msra.mxu0 %v944
        %946 = vmatprep.subr.mxu0 0.0
        %v947 = vand.u32 %v202, 4294901760
        %v948 = vsub.f32 %v202, %v947
        %v949 = vand.u32 %v948, 4294901760
        %950 = vmatpush1.msra.mxu0 %v949
        %951 = vmatprep.subr.mxu0 0.0
        %v952 = vand.u32 %v203, 4294901760
        %v953 = vsub.f32 %v203, %v952
        %v954 = vand.u32 %v953, 4294901760
        %955 = vmatpush1.msra.mxu0 %v954
        %v956 = vand.u32 %v171, 4294901760
        %957 = vmatprep.mubr.f32.mxu0 %v956
        %v958 = vand.u32 %v170, 4294901760
        %959 = vmatmul.mubr.f32.gmra.mrb[0].mxu0 %v958
        %v960 = vpop.f32.mrb[0].mxu0
        %v961 = vadd.f32 %v793, %v960
        %v962 = vpop.f32.mrb[0].mxu0
        %963 = vdwg.mxu0
        %964 = vmatprep.subr.mxu0 0.0
        %v965 = vand.u32 %v172, 4294901760
        %966 = vmatpush1.msra.mxu0 %v965
        %967 = vmatprep.subr.mxu0 0.0
        %v968 = vand.u32 %v173, 4294901760
        %969 = vmatpush1.msra.mxu0 %v968
        %970 = vmatprep.subr.mxu0 0.0
        %v971 = vand.u32 %v174, 4294901760
        %972 = vmatpush1.msra.mxu0 %v971
        %973 = vmatprep.subr.mxu0 0.0
        %v974 = vand.u32 %v175, 4294901760
        %975 = vmatpush1.msra.mxu0 %v974
        %976 = vmatprep.subr.mxu0 0.0
        %v977 = vand.u32 %v176, 4294901760
        %978 = vmatpush1.msra.mxu0 %v977
        %979 = vmatprep.subr.mxu0 0.0
        %v980 = vand.u32 %v177, 4294901760
        %981 = vmatpush1.msra.mxu0 %v980
        %982 = vmatprep.subr.mxu0 0.0
        %v983 = vand.u32 %v178, 4294901760
        %984 = vmatpush1.msra.mxu0 %v983
        %985 = vmatprep.subr.mxu0 0.0
        %v986 = vand.u32 %v179, 4294901760
        %987 = vmatpush1.msra.mxu0 %v986
        %988 = vmatprep.subr.mxu0 0.0
        %v989 = vand.u32 %v180, 4294901760
        %990 = vmatpush1.msra.mxu0 %v989
        %991 = vmatprep.subr.mxu0 0.0
        %v992 = vand.u32 %v181, 4294901760
        %993 = vmatpush1.msra.mxu0 %v992
        %994 = vmatprep.subr.mxu0 0.0
        %v995 = vand.u32 %v182, 4294901760
        %996 = vmatpush1.msra.mxu0 %v995
        %997 = vmatprep.subr.mxu0 0.0
        %v998 = vand.u32 %v183, 4294901760
        %999 = vmatpush1.msra.mxu0 %v998
        %1000 = vmatprep.subr.mxu0 0.0
        %v1001 = vand.u32 %v184, 4294901760
        %1002 = vmatpush1.msra.mxu0 %v1001
        %1003 = vmatprep.subr.mxu0 0.0
        %v1004 = vand.u32 %v185, 4294901760
        %1005 = vmatpush1.msra.mxu0 %v1004
        %1006 = vmatprep.subr.mxu0 0.0
        %v1007 = vand.u32 %v186, 4294901760
        %1008 = vmatpush1.msra.mxu0 %v1007
        %1009 = vmatprep.subr.mxu0 0.0
        %v1010 = vand.u32 %v187, 4294901760
        %1011 = vmatpush1.msra.mxu0 %v1010
        %1012 = vmatprep.subr.mxu0 0.0
        %v1013 = vand.u32 %v188, 4294901760
        %1014 = vmatpush1.msra.mxu0 %v1013
        %1015 = vmatprep.subr.mxu0 0.0
        %v1016 = vand.u32 %v189, 4294901760
        %1017 = vmatpush1.msra.mxu0 %v1016
        %1018 = vmatprep.subr.mxu0 0.0
        %v1019 = vand.u32 %v190, 4294901760
        %1020 = vmatpush1.msra.mxu0 %v1019
        %1021 = vmatprep.subr.mxu0 0.0
        %v1022 = vand.u32 %v191, 4294901760
        %1023 = vmatpush1.msra.mxu0 %v1022
        %1024 = vmatprep.subr.mxu0 0.0
        %v1025 = vand.u32 %v192, 4294901760
        %1026 = vmatpush1.msra.mxu0 %v1025
        %1027 = vmatprep.subr.mxu0 0.0
        %v1028 = vand.u32 %v193, 4294901760
        %1029 = vmatpush1.msra.mxu0 %v1028
        %1030 = vmatprep.subr.mxu0 0.0
        %v1031 = vand.u32 %v194, 4294901760
        %1032 = vmatpush1.msra.mxu0 %v1031
        %1033 = vmatprep.subr.mxu0 0.0
        %v1034 = vand.u32 %v195, 4294901760
        %1035 = vmatpush1.msra.mxu0 %v1034
        %1036 = vmatprep.subr.mxu0 0.0
        %v1037 = vand.u32 %v196, 4294901760
        %1038 = vmatpush1.msra.mxu0 %v1037
        %1039 = vmatprep.subr.mxu0 0.0
        %v1040 = vand.u32 %v197, 4294901760
        %1041 = vmatpush1.msra.mxu0 %v1040
        %1042 = vmatprep.subr.mxu0 0.0
        %v1043 = vand.u32 %v198, 4294901760
        %1044 = vmatpush1.msra.mxu0 %v1043
        %1045 = vmatprep.subr.mxu0 0.0
        %v1046 = vand.u32 %v199, 4294901760
        %1047 = vmatpush1.msra.mxu0 %v1046
        %1048 = vmatprep.subr.mxu0 0.0
        %v1049 = vand.u32 %v200, 4294901760
        %1050 = vmatpush1.msra.mxu0 %v1049
        %1051 = vmatprep.subr.mxu0 0.0
        %v1052 = vand.u32 %v201, 4294901760
        %1053 = vmatpush1.msra.mxu0 %v1052
        %1054 = vmatprep.subr.mxu0 0.0
        %v1055 = vand.u32 %v202, 4294901760
        %1056 = vmatpush1.msra.mxu0 %v1055
        %1057 = vmatprep.subr.mxu0 0.0
        %v1058 = vand.u32 %v203, 4294901760
        %1059 = vmatpush1.msra.mxu0 %v1058
        %v1060 = vand.u32 %v171, 4294901760
        %1061 = vmatprep.mubr.f32.mxu0 %v1060
        %v1062 = vand.u32 %v170, 4294901760
        %1063 = vmatmul.mubr.f32.gmra.mrb[0].mxu0 %v1062
        %v1064 = vpop.f32.mrb[0].mxu0
        %v1065 = vadd.f32 %v961, %v1064
        %v1066 = vpop.f32.mrb[0].mxu0
        %1067 = vdwg.mxu0
        %1068 = vst [vmem:[%s164] sm:$0xff] %v1065
        %s1069 = sand.u32 %s94, 1
        %s1070 = scalar_lea.sflag [#allocation4], %s1069
        %s1071 = sand.u32 %s94, 1
        %s1072 = smul.addr %s1071, 8
        %s1073 = scalar_lea.vmem [#allocation3], %s1072
        // Predicated region
        $region33: #{dumb_linear.1} parent=31 // pred_check
          %p1074 = pneg %p104
        $region34: #{dumb_linear.1} parent=31 // pred_check_branch
          %1076 = sbr.rel (%p1074) target = $region36
        $region35: #{dumb_linear.1} parent=31 // pred_region
          %s1078 = ssub.s32 128, 128
          %1079 = vsyncadd %s1070, %s1078
          %s1080 = smul.addr %s18, 128
          %s1081 = scalar_lea.hbm %s3, %s1080
          %s1083 = sshll.u32 %s1073, 4
          %s1084 = int_to_ptr.vmem [resolvable:$true] %s1083
          %1086 = dma.vmem_to_hbm [thread:$0]  %s1084, 128, %s1081, %s1070
        $region36: #{dumb_linear.1} parent=31 // pred_fallthru
          _
      $region32: #{dumb_linear.1} parent=5 // pred_fallthru
        _
      %p1087 = scmp.le.s32.totalorder 2, %s13
      // Predicated region
      $region37: #{dumb_linear.1} parent=5 // pred_check
        %p1088 = pneg %p1087
      $region38: #{dumb_linear.1} parent=5 // pred_check_branch
        %1090 = sbr.rel (%p1088) target = $region40
      $region39: #{dumb_linear.1} parent=5 // pred_region
        %s1091 = ssub.s32 %s13, 2
        // Predicated region
        $region41: #{dumb_linear.1} parent=39 // pred_check
          %p1092 = pneg %p110
        $region42: #{dumb_linear.1} parent=39 // pred_check_branch
          %1094 = sbr.rel (%p1092) target = $region44
        $region43: #{dumb_linear.1} parent=39 // pred_region
          %s1095 = sand.u32 %s95, 1
          %s1096 = scalar_lea.sflag [#allocation4], %s1095
          %s1097 = sand.u32 %s95, 1
          %s1098 = smul.addr %s1097, 8
          %s1099 = scalar_lea.vmem [#allocation3], %s1098
          %1100 = dma.done %s1096, 128
        $region44: #{dumb_linear.1} parent=39 // pred_fallthru
          _
      $region40: #{dumb_linear.1} parent=5 // pred_fallthru
        _
    $region6: #{dumb_linear.1} parent=1 // loop_footer
      %s17 = sadd.s32 1, %s13
    $region7: #{dumb_linear.1} parent=1 // loop_footer_branch
      %12 = sbr.rel target = $region3
    $region8: #{dumb_linear.1} parent=1 // loop_exit
      _
    %1101 = vsyncpa [#allocation4], 1
    %s1102 = scalar_lea.sflag [#allocation4], 1
    %1103 = vsyncpa %s1102, 1

</llo_original>
